<compile_context>
chip_gen: v7x
topology: tpu7x:2x2x1
jax: 0.10.0
libtpu: 0.0.40
codegen_flags: <defaults>
</compile_context>

<pallas_src>
import jax
import jax.numpy as jnp
from jax.experimental import pallas as pl
from jax.experimental.pallas import tpu as pltpu


def _mlp_kernel(xt_ref, w1_ref, b1_ref, w2_ref, b2_ref, w3_ref, b3_ref,
                w4_ref, b4_ref, o_ref):
    # One batch tile per grid step; batch sits on the lane axis.
    xt = xt_ref[...]                                                   # (D, tb) bf16
    h = jnp.dot(w1_ref[...], xt, preferred_element_type=jnp.float32)   # (128, tb) f32
    h = jnp.maximum(h + b1_ref[...], 0.0)
    h = jnp.dot(w2_ref[...], h.astype(jnp.bfloat16),
                preferred_element_type=jnp.float32)                    # (64, tb)
    h = jnp.maximum(h + b2_ref[...], 0.0)
    h = jnp.dot(w3_ref[...], h.astype(jnp.bfloat16),
                preferred_element_type=jnp.float32)                    # (32, tb)
    h = jnp.maximum(h + b3_ref[...], 0.0)
    # Last layer (32 -> 1): VPU broadcast-multiply + sublane reduce (XLU) keeps the
    # result lane-dense and avoids a near-empty MXU matmul.
    y = jnp.sum(h * w4_ref[...], axis=0, keepdims=True) + b4_ref[...]  # (1, tb)
    o_ref[...] = y.astype(o_ref.dtype)


def _round_up(x, m):
    return ((x + m - 1) // m) * m


def ann_regressor_forward(x, params, *, tile_b=None):
    """Forward pass of ANNRegressor. x: (B, input_dim) f32 -> (B, 1) f32.

    params: list of (weight (out, in), bias (out,)) in PyTorch nn.Linear layout.
    """
    (w1, b1), (w2, b2), (w3, b3), (w4, b4) = params
    B, D = x.shape
    H1, H2, H3 = w1.shape[0], w2.shape[0], w3.shape[0]

    # Lane-dense batch tile: multiple of 128, capped at 512; pad batch instead of asserting.
    if tile_b is None:
        tile_b = 512 if B >= 512 else _round_up(B, 128)
    assert tile_b % 128 == 0, "tile_b must be a multiple of 128"
    B_pad = _round_up(B, tile_b)
    grid = (B_pad // tile_b,)

    # Batch on the lane axis: x^T, zero-padded along the batch axis, bf16 for the MXU.
    xt = jnp.zeros((D, B_pad), jnp.bfloat16).at[:, :B].set(x.T.astype(jnp.bfloat16))

    # bf16 MXU operands; biases / final-layer weight stay f32 (VPU path).
    w1p = w1.astype(jnp.bfloat16)              # (128, D)
    w2p = w2.astype(jnp.bfloat16)              # (64, 128)
    w3p = w3.astype(jnp.bfloat16)              # (32, 64)
    b1p = b1.reshape(H1, 1).astype(jnp.float32)
    b2p = b2.reshape(H2, 1).astype(jnp.float32)
    b3p = b3.reshape(H3, 1).astype(jnp.float32)
    w4p = w4.reshape(H3, 1).astype(jnp.float32)  # (32, 1) used on the VPU
    b4p = b4.reshape(1, 1).astype(jnp.float32)

    def full(arr):
        # whole-array block, same block for every grid step (DMA'd once, stays in VMEM)
        return pl.BlockSpec(arr.shape, lambda i: (0,) * arr.ndim)

    out = pl.pallas_call(
        _mlp_kernel,
        out_shape=jax.ShapeDtypeStruct((1, B_pad), jnp.float32),
        grid_spec=pltpu.PrefetchScalarGridSpec(
            num_scalar_prefetch=0,
            grid=grid,
            in_specs=[
                pl.BlockSpec((D, tile_b), lambda i: (0, i)),   # x^T tile (lane = batch)
                full(w1p), full(b1p),
                full(w2p), full(b2p),
                full(w3p), full(b3p),
                full(w4p), full(b4p),
            ],
            out_specs=pl.BlockSpec((1, tile_b), lambda i: (0, i)),  # lane-dense output row
        ),
        compiler_params=pltpu.CompilerParams(
            dimension_semantics=("parallel",)),   # shards grid steps across TCs on v7x
    )(xt, w1p, b1p, w2p, b2p, w3p, b3p, w4p, b4p)

    return out[0, :B].reshape(B, 1)


def init_params(key, input_dim):
    """Deterministic init mimicking nn.Linear default (U(-1/sqrt(fan_in), +)).

    Weights stored in PyTorch layout: (out_features, in_features)."""
    dims = [input_dim, 128, 64, 32, 1]
    params = []
    for i in range(4):
        key, kw, kb = jax.random.split(key, 3)
        fan_in, fan_out = dims[i], dims[i + 1]
        bound = 1.0 / (fan_in ** 0.5)
        w = jax.random.uniform(kw, (fan_out, fan_in), jnp.float32, -bound, bound)
        b = jax.random.uniform(kb, (fan_out,), jnp.float32, -bound, bound)
        params.append((w, b))
    return params


def reference_forward_f32(x, params):
    h = x
    for i, (w, b) in enumerate(params):
        h = h @ w.T + b
        if i < 3:
            h = jnp.maximum(h, 0.0)
    return h


def reference_forward_bf16(x, params):
    # Mirrors the kernel numerics: bf16 MXU inputs, f32 accumulation / elementwise.
    (w1, b1), (w2, b2), (w3, b3), (w4, b4) = params
    h = jnp.dot(x.astype(jnp.bfloat16), w1.T.astype(jnp.bfloat16),
                preferred_element_type=jnp.float32) + b1
    h = jnp.maximum(h, 0.0)
    h = jnp.dot(h.astype(jnp.bfloat16), w2.T.astype(jnp.bfloat16),
                preferred_element_type=jnp.float32) + b2
    h = jnp.maximum(h, 0.0)
    h = jnp.dot(h.astype(jnp.bfloat16), w3.T.astype(jnp.bfloat16),
                preferred_element_type=jnp.float32) + b3
    h = jnp.maximum(h, 0.0)
    return jnp.dot(h, w4.T) + b4


if __name__ == "__main__":
    key = jax.random.PRNGKey(0)
    key, kx = jax.random.split(key)

    # Small demo shapes; batch=300 exercises both batch padding and a multi-step grid.
    batch, input_dim = 300, 16
    x = jax.random.normal(kx, (batch, input_dim), jnp.float32)
    params = init_params(key, input_dim)

    # Explicit tile: grid of 3 steps (B_pad = 384).
    out = ann_regressor_forward(x, params, tile_b=128)
    out = jax.block_until_ready(out)
    assert out.shape == (batch, 1)

    ref_exact = reference_forward_bf16(x, params)   # same numerics as the kernel
    ref_f32 = reference_forward_f32(x, params)      # pure-f32 PyTorch semantics
    assert jnp.allclose(out, ref_exact, atol=1e-3, rtol=1e-3)
    assert jnp.allclose(out, ref_f32, atol=5e-2, rtol=5e-2)

    # Default tile selection path (single full-batch tile, grid of 1).
    out2 = jax.block_until_ready(ann_regressor_forward(x, params))
    assert out2.shape == (batch, 1)
    assert jnp.allclose(out2, ref_exact, atol=1e-3, rtol=1e-3)

    print("KERNEL_OK")
</pallas_src>

<mosaic_0001>
module attributes {stable_mosaic.version = 11 : i64} {
  func.func @_mlp_kernel(%arg0: i32, %arg1: memref<16x128xbf16, #tpu.memory_space<vmem>>, %arg2: memref<128x16xbf16, #tpu.memory_space<vmem>>, %arg3: memref<128x1xf32, #tpu.memory_space<vmem>>, %arg4: memref<64x128xbf16, #tpu.memory_space<vmem>>, %arg5: memref<64x1xf32, #tpu.memory_space<vmem>>, %arg6: memref<32x64xbf16, #tpu.memory_space<vmem>>, %arg7: memref<32x1xf32, #tpu.memory_space<vmem>>, %arg8: memref<32x1xf32, #tpu.memory_space<vmem>>, %arg9: memref<1x1xf32, #tpu.memory_space<vmem>>, %arg10: memref<1x128xf32, #tpu.memory_space<vmem>>) attributes {dimension_semantics = [#tpu.dimension_semantics<parallel>], iteration_bounds = array<i64: 3>, scalar_prefetch = 0 : i64, scratch_operands = 0 : i64, tpu.core_type = #tpu.core_type<tc>, window_params = [{transform_indices = @transform_0, window_bounds = array<i64: 16, 128>}, {pipeline_mode = #tpu.pipeline_mode<synchronous>, transform_indices = @transform_1, window_bounds = array<i64: 128, 16>}, {pipeline_mode = #tpu.pipeline_mode<synchronous>, transform_indices = @transform_2, window_bounds = array<i64: 128, 1>}, {pipeline_mode = #tpu.pipeline_mode<synchronous>, transform_indices = @transform_3, window_bounds = array<i64: 64, 128>}, {pipeline_mode = #tpu.pipeline_mode<synchronous>, transform_indices = @transform_4, window_bounds = array<i64: 64, 1>}, {pipeline_mode = #tpu.pipeline_mode<synchronous>, transform_indices = @transform_5, window_bounds = array<i64: 32, 64>}, {pipeline_mode = #tpu.pipeline_mode<synchronous>, transform_indices = @transform_6, window_bounds = array<i64: 32, 1>}, {pipeline_mode = #tpu.pipeline_mode<synchronous>, transform_indices = @transform_7, window_bounds = array<i64: 32, 1>}, {pipeline_mode = #tpu.pipeline_mode<synchronous>, transform_indices = @transform_8, window_bounds = array<i64: 1, 1>}, {transform_indices = @transform_9, window_bounds = array<i64: 1, 128>}]} {
    %c0 = arith.constant 0 : index
    %c0_0 = arith.constant 0 : index
    %0 = vector.load %arg1[%c0, %c0_0] : memref<16x128xbf16, #tpu.memory_space<vmem>>, vector<16x128xbf16>
    %c0_1 = arith.constant 0 : index
    %c0_2 = arith.constant 0 : index
    %1 = vector.load %arg2[%c0_1, %c0_2] : memref<128x16xbf16, #tpu.memory_space<vmem>>, vector<128x16xbf16>
    %cst = arith.constant dense<0.000000e+00> : vector<128x128xf32>
    %2 = tpu.matmul %1, %0, %cst {dimension_numbers = #tpu.dot_dimension_numbers<[1], [0], [0], [1], [0, 0, 1, 1], [], []>} : vector<128x16xbf16>, vector<16x128xbf16>, vector<128x128xf32> -> vector<128x128xf32>
    %c0_3 = arith.constant 0 : index
    %c0_4 = arith.constant 0 : index
    %3 = vector.load %arg3[%c0_3, %c0_4] : memref<128x1xf32, #tpu.memory_space<vmem>>, vector<128x1xf32>
    %4 = vector.broadcast %3 : vector<128x1xf32> to vector<128x128xf32>
    %5 = arith.addf %2, %4 : vector<128x128xf32>
    %cst_5 = arith.constant 0.000000e+00 : f32
    %6 = vector.broadcast %cst_5 : f32 to vector<128x128xf32>
    %7 = arith.maximumf %5, %6 : vector<128x128xf32>
    %c0_6 = arith.constant 0 : index
    %c0_7 = arith.constant 0 : index
    %8 = vector.load %arg4[%c0_6, %c0_7] : memref<64x128xbf16, #tpu.memory_space<vmem>>, vector<64x128xbf16>
    %9 = arith.truncf %7 : vector<128x128xf32> to vector<128x128xbf16>
    %cst_8 = arith.constant dense<0.000000e+00> : vector<64x128xf32>
    %10 = tpu.matmul %8, %9, %cst_8 {dimension_numbers = #tpu.dot_dimension_numbers<[1], [0], [0], [1], [0, 0, 1, 1], [], []>} : vector<64x128xbf16>, vector<128x128xbf16>, vector<64x128xf32> -> vector<64x128xf32>
    %c0_9 = arith.constant 0 : index
    %c0_10 = arith.constant 0 : index
    %11 = vector.load %arg5[%c0_9, %c0_10] : memref<64x1xf32, #tpu.memory_space<vmem>>, vector<64x1xf32>
    %12 = vector.broadcast %11 : vector<64x1xf32> to vector<64x128xf32>
    %13 = arith.addf %10, %12 : vector<64x128xf32>
    %cst_11 = arith.constant 0.000000e+00 : f32
    %14 = vector.broadcast %cst_11 : f32 to vector<64x128xf32>
    %15 = arith.maximumf %13, %14 : vector<64x128xf32>
    %c0_12 = arith.constant 0 : index
    %c0_13 = arith.constant 0 : index
    %16 = vector.load %arg6[%c0_12, %c0_13] : memref<32x64xbf16, #tpu.memory_space<vmem>>, vector<32x64xbf16>
    %17 = arith.truncf %15 : vector<64x128xf32> to vector<64x128xbf16>
    %cst_14 = arith.constant dense<0.000000e+00> : vector<32x128xf32>
    %18 = tpu.matmul %16, %17, %cst_14 {dimension_numbers = #tpu.dot_dimension_numbers<[1], [0], [0], [1], [0, 0, 1, 1], [], []>} : vector<32x64xbf16>, vector<64x128xbf16>, vector<32x128xf32> -> vector<32x128xf32>
    %c0_15 = arith.constant 0 : index
    %c0_16 = arith.constant 0 : index
    %19 = vector.load %arg7[%c0_15, %c0_16] : memref<32x1xf32, #tpu.memory_space<vmem>>, vector<32x1xf32>
    %20 = vector.broadcast %19 : vector<32x1xf32> to vector<32x128xf32>
    %21 = arith.addf %18, %20 : vector<32x128xf32>
    %cst_17 = arith.constant 0.000000e+00 : f32
    %22 = vector.broadcast %cst_17 : f32 to vector<32x128xf32>
    %23 = arith.maximumf %21, %22 : vector<32x128xf32>
    %c0_18 = arith.constant 0 : index
    %c0_19 = arith.constant 0 : index
    %24 = vector.load %arg8[%c0_18, %c0_19] : memref<32x1xf32, #tpu.memory_space<vmem>>, vector<32x1xf32>
    %25 = vector.broadcast %24 : vector<32x1xf32> to vector<32x128xf32>
    %26 = arith.mulf %23, %25 : vector<32x128xf32>
    %cst_20 = arith.constant dense<0.000000e+00> : vector<128xf32>
    %27 = vector.multi_reduction <add>, %26, %cst_20 [0] : vector<32x128xf32> to vector<128xf32>
    %28 = vector.shape_cast %27 : vector<128xf32> to vector<1x128xf32>
    %c0_21 = arith.constant 0 : index
    %c0_22 = arith.constant 0 : index
    %29 = vector.load %arg9[%c0_21, %c0_22] : memref<1x1xf32, #tpu.memory_space<vmem>>, vector<1x1xf32>
    %30 = vector.broadcast %29 : vector<1x1xf32> to vector<1x128xf32>
    %31 = arith.addf %28, %30 : vector<1x128xf32>
    %c0_23 = arith.constant 0 : index
    %c0_24 = arith.constant 0 : index
    %32 = vector.load %arg10[%c0_23, %c0_24] : memref<1x128xf32, #tpu.memory_space<vmem>>, vector<1x128xf32>
    tpu.vector_store %arg10[%c0_23, %c0_24], %31 {strides = array<i32>} : memref<1x128xf32, #tpu.memory_space<vmem>>, vector<1x128xf32>,
    return
  }
  func.func @transform_0(%arg0: i32) -> (i32, i32) {
    %c0_i32 = arith.constant 0 : i32
    %c0_i32_0 = arith.constant 0 : i32
    return %c0_i32, %arg0 : i32, i32
  }
  func.func @transform_1(%arg0: i32) -> (i32, i32) {
    %c0_i32 = arith.constant 0 : i32
    %c0_i32_0 = arith.constant 0 : i32
    %c0_i32_1 = arith.constant 0 : i32
    return %c0_i32, %c0_i32_0 : i32, i32
  }
  func.func @transform_2(%arg0: i32) -> (i32, i32) {
    %c0_i32 = arith.constant 0 : i32
    %c0_i32_0 = arith.constant 0 : i32
    %c0_i32_1 = arith.constant 0 : i32
    return %c0_i32, %c0_i32_0 : i32, i32
  }
  func.func @transform_3(%arg0: i32) -> (i32, i32) {
    %c0_i32 = arith.constant 0 : i32
    %c0_i32_0 = arith.constant 0 : i32
    %c0_i32_1 = arith.constant 0 : i32
    return %c0_i32, %c0_i32_0 : i32, i32
  }
  func.func @transform_4(%arg0: i32) -> (i32, i32) {
    %c0_i32 = arith.constant 0 : i32
    %c0_i32_0 = arith.constant 0 : i32
    %c0_i32_1 = arith.constant 0 : i32
    return %c0_i32, %c0_i32_0 : i32, i32
  }
  func.func @transform_5(%arg0: i32) -> (i32, i32) {
    %c0_i32 = arith.constant 0 : i32
    %c0_i32_0 = arith.constant 0 : i32
    %c0_i32_1 = arith.constant 0 : i32
    return %c0_i32, %c0_i32_0 : i32, i32
  }
  func.func @transform_6(%arg0: i32) -> (i32, i32) {
    %c0_i32 = arith.constant 0 : i32
    %c0_i32_0 = arith.constant 0 : i32
    %c0_i32_1 = arith.constant 0 : i32
    return %c0_i32, %c0_i32_0 : i32, i32
  }
  func.func @transform_7(%arg0: i32) -> (i32, i32) {
    %c0_i32 = arith.constant 0 : i32
    %c0_i32_0 = arith.constant 0 : i32
    %c0_i32_1 = arith.constant 0 : i32
    return %c0_i32, %c0_i32_0 : i32, i32
  }
  func.func @transform_8(%arg0: i32) -> (i32, i32) {
    %c0_i32 = arith.constant 0 : i32
    %c0_i32_0 = arith.constant 0 : i32
    %c0_i32_1 = arith.constant 0 : i32
    return %c0_i32, %c0_i32_0 : i32, i32
  }
  func.func @transform_9(%arg0: i32) -> (i32, i32) {
    %c0_i32 = arith.constant 0 : i32
    %c0_i32_0 = arith.constant 0 : i32
    return %c0_i32, %arg0 : i32, i32
  }
}

</mosaic_0001>

<llo_original>
// kernel: tpu_custom_call.1
$region0: #{tpu_custom_call.1}
  #allocation0 [shape = 'u32[]', space=smem, size = 0x4, offset = 0x4, fixed_abs, tag = 'smem constant byte address 0x4 - core index']
  #allocation1 [shape = 'u32[144,128]{1,0:T(1,128)}', space=vmem, size = 0x12000, scoped, tag = 'internal scratch']
  #allocation2 [shape = 'f32[1,1]{1,0:T(1,128)S(1)}', space=vmem, size = 0x200, scoped, tag = 'scoped memory for tpu_custom_call.1']
  %s0 = inlined_call_operand.vmem [shape: bf16[16,384], index: 0, kind: input, shape index: {}]
  %s1 = inlined_call_operand.vmem [shape: bf16[128,16], index: 1, kind: input, shape index: {}]
  %s2 = inlined_call_operand.vmem [shape: f32[128,1], index: 2, kind: input, shape index: {}]
  %s3 = inlined_call_operand.vmem [shape: bf16[64,128], index: 3, kind: input, shape index: {}]
  %s4 = inlined_call_operand.vmem [shape: f32[64,1], index: 4, kind: input, shape index: {}]
  %s5 = inlined_call_operand.vmem [shape: bf16[32,64], index: 5, kind: input, shape index: {}]
  %s6 = inlined_call_operand.vmem [shape: f32[32,1], index: 6, kind: input, shape index: {}]
  %s7 = inlined_call_operand.vmem [shape: f32[32,1], index: 7, kind: input, shape index: {}]
  %s8 = inlined_call_operand.<no memory space> [shape: f32[1,1], index: 8, kind: input, shape index: {}]
  %s9 = inlined_call_operand.hbm [shape: f32[1,384], index: 9, kind: output, shape index: {}]
  %s10 = sld [smem:[#allocation0]]
  $region110: #{tpu_custom_call.1} parent=0
    _
  %s12 = ssub.s32 1, %s10
  %s13 = scalar_select 0, %s12, %s10
  %v14 = vstv %s8
  %15 = vst [vmem:[#allocation2] sm:$0x1] %v14
  $region1: #{tpu_custom_call.1} parent=0
    #allocation3 [shape = 'u8[8192]{0}', space=vmem, size = 0x2000, scoped, tag = 'input window, operand 0']
    #allocation4 [shape = 'u8[1024]{0}', space=vmem, size = 0x400, scoped, tag = 'output window, operand 0']
    #allocation5 [shape = 's32[2]{0}', space=sflag, size = 0x8, scoped, tag = 'scoped memory for tpu_custom_call.1']
    %16 = vsyncpa [#allocation5], 0
    %s17 = scalar_lea.sflag [#allocation5], 1
    %18 = vsyncpa %s17, 0
    loop: start=0, step=1, limit=5
    $region2: #{tpu_custom_call.1} parent=1 // loop_pre_header
      _
    $region3: #{tpu_custom_call.1} parent=1 // loop_header
      %s20 = sphi 0, %s24
      %p21 = scmp.ge.s32.totalorder %s20, 5
      %s30 = sphi 0, %s32
      %s33 = sphi 0, %s30
      %s34 = sphi 0, %s33
      %s50 = sphi 0, %s34
      %s54 = sphi 0, %s54
      %s56 = sphi 0, %s54
      %s57 = sphi 0, %s56
      %s71 = sphi 0, %s57
      %s75 = sphi 0, %s75
      %s77 = sphi 0, %s75
      %s78 = sphi 0, %s77
      %s92 = sphi 0, %s78
      %s96 = sphi 0, %s96
      %s98 = sphi 0, %s96
      %s99 = sphi 0, %s98
      %s113 = sphi 0, %s99
      %s117 = sphi 0, %s117
      %s119 = sphi 0, %s117
      %s120 = sphi 0, %s119
      %s134 = sphi 0, %s120
      %s138 = sphi 0, %s138
      %s140 = sphi 0, %s138
      %s141 = sphi 0, %s140
      %s155 = sphi 0, %s141
      %s159 = sphi 0, %s159
      %s161 = sphi 0, %s159
      %s162 = sphi 0, %s161
      %s176 = sphi 0, %s162
      %s180 = sphi 0, %s180
      %s182 = sphi 0, %s180
      %s183 = sphi 0, %s182
      %s197 = sphi 0, %s183
      %s201 = sphi 0, %s201
      %s203 = sphi 0, %s201
      %s204 = sphi 0, %s203
      %s218 = sphi 0, %s204
      %s224 = sphi 0, %s226
      %s227 = sphi 0, %s224
      %s228 = sphi 0, %s227
      %s244 = sphi 0, %s228
    $region4: #{tpu_custom_call.1} parent=1 // loop_header_branch
      %23 = sbr.rel (%p21) target = $region8
    $region5: #{tpu_custom_call.1} parent=1 // loop_body
      %s25 = ssub.s32 %s20, 1
      %s26 = ssub.s32 %s20, 2
      %s27 = sadd.s32 %s20, 1
      %s28 = ssub.s32 %s20, %s27
      %p29 = scmp.eq.s32.totalorder %s28, 0
      %s31 = sadd.s32 %s30, 1
      %s32 = scalar_select %p29, %s30, %s31
      %p35 = pneg %p29
      %p36 = scmp.eq.s32.totalorder %s20, 2
      %p37 = por %p35, %p36
      %p38 = scmp.ne.s32.totalorder %s30, %s33
      %p39 = scmp.eq.s32.totalorder %s20, 0
      %p40 = por %p38, %p39
      %p41 = scmp.ne.s32.totalorder %s30, %s33
      %p42 = scmp.eq.s32.totalorder %s25, 2
      %p43 = por %p41, %p42
      %p44 = scmp.ne.s32.totalorder %s33, %s34
      %p45 = scmp.eq.s32.totalorder %s25, 0
      %p46 = por %p44, %p45
      %p47 = scmp.ne.s32.totalorder %s33, %s34
      %p48 = scmp.eq.s32.totalorder %s26, 2
      %p49 = por %p47, %p48
      %p51 = scmp.ne.s32.totalorder %s34, %s50
      %p52 = scmp.eq.s32.totalorder %s26, 0
      %p53 = por %p51, %p52
      %s55 = sadd.s32 %s54, 1
      %p58 = scmp.eq.s32.totalorder %s20, 2
      %p59 = scmp.ne.s32.totalorder %s54, %s56
      %p60 = scmp.eq.s32.totalorder %s20, 0
      %p61 = por %p59, %p60
      %p62 = scmp.ne.s32.totalorder %s54, %s56
      %p63 = scmp.eq.s32.totalorder %s25, 2
      %p64 = por %p62, %p63
      %p65 = scmp.ne.s32.totalorder %s56, %s57
      %p66 = scmp.eq.s32.totalorder %s25, 0
      %p67 = por %p65, %p66
      %p68 = scmp.ne.s32.totalorder %s56, %s57
      %p69 = scmp.eq.s32.totalorder %s26, 2
      %p70 = por %p68, %p69
      %p72 = scmp.ne.s32.totalorder %s57, %s71
      %p73 = scmp.eq.s32.totalorder %s26, 0
      %p74 = por %p72, %p73
      %s76 = sadd.s32 %s75, 1
      %p79 = scmp.eq.s32.totalorder %s20, 2
      %p80 = scmp.ne.s32.totalorder %s75, %s77
      %p81 = scmp.eq.s32.totalorder %s20, 0
      %p82 = por %p80, %p81
      %p83 = scmp.ne.s32.totalorder %s75, %s77
      %p84 = scmp.eq.s32.totalorder %s25, 2
      %p85 = por %p83, %p84
      %p86 = scmp.ne.s32.totalorder %s77, %s78
      %p87 = scmp.eq.s32.totalorder %s25, 0
      %p88 = por %p86, %p87
      %p89 = scmp.ne.s32.totalorder %s77, %s78
      %p90 = scmp.eq.s32.totalorder %s26, 2
      %p91 = por %p89, %p90
      %p93 = scmp.ne.s32.totalorder %s78, %s92
      %p94 = scmp.eq.s32.totalorder %s26, 0
      %p95 = por %p93, %p94
      %s97 = sadd.s32 %s96, 1
      %p100 = scmp.eq.s32.totalorder %s20, 2
      %p101 = scmp.ne.s32.totalorder %s96, %s98
      %p102 = scmp.eq.s32.totalorder %s20, 0
      %p103 = por %p101, %p102
      %p104 = scmp.ne.s32.totalorder %s96, %s98
      %p105 = scmp.eq.s32.totalorder %s25, 2
      %p106 = por %p104, %p105
      %p107 = scmp.ne.s32.totalorder %s98, %s99
      %p108 = scmp.eq.s32.totalorder %s25, 0
      %p109 = por %p107, %p108
      %p110 = scmp.ne.s32.totalorder %s98, %s99
      %p111 = scmp.eq.s32.totalorder %s26, 2
      %p112 = por %p110, %p111
      %p114 = scmp.ne.s32.totalorder %s99, %s113
      %p115 = scmp.eq.s32.totalorder %s26, 0
      %p116 = por %p114, %p115
      %s118 = sadd.s32 %s117, 1
      %p121 = scmp.eq.s32.totalorder %s20, 2
      %p122 = scmp.ne.s32.totalorder %s117, %s119
      %p123 = scmp.eq.s32.totalorder %s20, 0
      %p124 = por %p122, %p123
      %p125 = scmp.ne.s32.totalorder %s117, %s119
      %p126 = scmp.eq.s32.totalorder %s25, 2
      %p127 = por %p125, %p126
      %p128 = scmp.ne.s32.totalorder %s119, %s120
      %p129 = scmp.eq.s32.totalorder %s25, 0
      %p130 = por %p128, %p129
      %p131 = scmp.ne.s32.totalorder %s119, %s120
      %p132 = scmp.eq.s32.totalorder %s26, 2
      %p133 = por %p131, %p132
      %p135 = scmp.ne.s32.totalorder %s120, %s134
      %p136 = scmp.eq.s32.totalorder %s26, 0
      %p137 = por %p135, %p136
      %s139 = sadd.s32 %s138, 1
      %p142 = scmp.eq.s32.totalorder %s20, 2
      %p143 = scmp.ne.s32.totalorder %s138, %s140
      %p144 = scmp.eq.s32.totalorder %s20, 0
      %p145 = por %p143, %p144
      %p146 = scmp.ne.s32.totalorder %s138, %s140
      %p147 = scmp.eq.s32.totalorder %s25, 2
      %p148 = por %p146, %p147
      %p149 = scmp.ne.s32.totalorder %s140, %s141
      %p150 = scmp.eq.s32.totalorder %s25, 0
      %p151 = por %p149, %p150
      %p152 = scmp.ne.s32.totalorder %s140, %s141
      %p153 = scmp.eq.s32.totalorder %s26, 2
      %p154 = por %p152, %p153
      %p156 = scmp.ne.s32.totalorder %s141, %s155
      %p157 = scmp.eq.s32.totalorder %s26, 0
      %p158 = por %p156, %p157
      %s160 = sadd.s32 %s159, 1
      %p163 = scmp.eq.s32.totalorder %s20, 2
      %p164 = scmp.ne.s32.totalorder %s159, %s161
      %p165 = scmp.eq.s32.totalorder %s20, 0
      %p166 = por %p164, %p165
      %p167 = scmp.ne.s32.totalorder %s159, %s161
      %p168 = scmp.eq.s32.totalorder %s25, 2
      %p169 = por %p167, %p168
      %p170 = scmp.ne.s32.totalorder %s161, %s162
      %p171 = scmp.eq.s32.totalorder %s25, 0
      %p172 = por %p170, %p171
      %p173 = scmp.ne.s32.totalorder %s161, %s162
      %p174 = scmp.eq.s32.totalorder %s26, 2
      %p175 = por %p173, %p174
      %p177 = scmp.ne.s32.totalorder %s162, %s176
      %p178 = scmp.eq.s32.totalorder %s26, 0
      %p179 = por %p177, %p178
      %s181 = sadd.s32 %s180, 1
      %p184 = scmp.eq.s32.totalorder %s20, 2
      %p185 = scmp.ne.s32.totalorder %s180, %s182
      %p186 = scmp.eq.s32.totalorder %s20, 0
      %p187 = por %p185, %p186
      %p188 = scmp.ne.s32.totalorder %s180, %s182
      %p189 = scmp.eq.s32.totalorder %s25, 2
      %p190 = por %p188, %p189
      %p191 = scmp.ne.s32.totalorder %s182, %s183
      %p192 = scmp.eq.s32.totalorder %s25, 0
      %p193 = por %p191, %p192
      %p194 = scmp.ne.s32.totalorder %s182, %s183
      %p195 = scmp.eq.s32.totalorder %s26, 2
      %p196 = por %p194, %p195
      %p198 = scmp.ne.s32.totalorder %s183, %s197
      %p199 = scmp.eq.s32.totalorder %s26, 0
      %p200 = por %p198, %p199
      %s202 = sadd.s32 %s201, 1
      %p205 = scmp.eq.s32.totalorder %s20, 2
      %p206 = scmp.ne.s32.totalorder %s201, %s203
      %p207 = scmp.eq.s32.totalorder %s20, 0
      %p208 = por %p206, %p207
      %p209 = scmp.ne.s32.totalorder %s201, %s203
      %p210 = scmp.eq.s32.totalorder %s25, 2
      %p211 = por %p209, %p210
      %p212 = scmp.ne.s32.totalorder %s203, %s204
      %p213 = scmp.eq.s32.totalorder %s25, 0
      %p214 = por %p212, %p213
      %p215 = scmp.ne.s32.totalorder %s203, %s204
      %p216 = scmp.eq.s32.totalorder %s26, 2
      %p217 = por %p215, %p216
      %p219 = scmp.ne.s32.totalorder %s204, %s218
      %p220 = scmp.eq.s32.totalorder %s26, 0
      %p221 = por %p219, %p220
      %s222 = ssub.s32 %s20, %s27
      %p223 = scmp.eq.s32.totalorder %s222, 0
      %s225 = sadd.s32 %s224, 1
      %s226 = scalar_select %p223, %s224, %s225
      %p229 = pneg %p223
      %p230 = scmp.eq.s32.totalorder %s20, 2
      %p231 = por %p229, %p230
      %p232 = scmp.ne.s32.totalorder %s224, %s227
      %p233 = scmp.eq.s32.totalorder %s20, 0
      %p234 = por %p232, %p233
      %p235 = scmp.ne.s32.totalorder %s224, %s227
      %p236 = scmp.eq.s32.totalorder %s25, 2
      %p237 = por %p235, %p236
      %p238 = scmp.ne.s32.totalorder %s227, %s228
      %p239 = scmp.eq.s32.totalorder %s25, 0
      %p240 = por %p238, %p239
      %p241 = scmp.ne.s32.totalorder %s227, %s228
      %p242 = scmp.eq.s32.totalorder %s26, 2
      %p243 = por %p241, %p242
      %p245 = scmp.ne.s32.totalorder %s228, %s244
      %p246 = scmp.eq.s32.totalorder %s26, 0
      %p247 = por %p245, %p246
      %p248 = scmp.le.s32.totalorder 1, %s20
      %p249 = scmp.lt.s32.totalorder %s20, 4
      %p250 = pnand %p248, %p249
      %p251 = pneg %p250
      // Predicated region
      $region9: #{tpu_custom_call.1} parent=5 // pred_check
        _
      $region10: #{tpu_custom_call.1} parent=5 // pred_check_branch
        %253 = sbr.rel (%p250) target = $region12
      $region11: #{tpu_custom_call.1} parent=5 // pred_region
        %s254 = ssub.s32 %s20, 1
        // Predicated region
        $region13: #{tpu_custom_call.1} parent=11 // pred_check
          %p255 = pneg %p67
        $region14: #{tpu_custom_call.1} parent=11 // pred_check_branch
          %257 = sbr.rel (%p255) target = $region16
        $region15: #{tpu_custom_call.1} parent=11 // pred_region
          _
        $region16: #{tpu_custom_call.1} parent=11 // pred_fallthru
          _
        // Predicated region
        $region17: #{tpu_custom_call.1} parent=11 // pred_check
          %p258 = pneg %p88
        $region18: #{tpu_custom_call.1} parent=11 // pred_check_branch
          %260 = sbr.rel (%p258) target = $region20
        $region19: #{tpu_custom_call.1} parent=11 // pred_region
          _
        $region20: #{tpu_custom_call.1} parent=11 // pred_fallthru
          _
        // Predicated region
        $region21: #{tpu_custom_call.1} parent=11 // pred_check
          %p261 = pneg %p109
        $region22: #{tpu_custom_call.1} parent=11 // pred_check_branch
          %263 = sbr.rel (%p261) target = $region24
        $region23: #{tpu_custom_call.1} parent=11 // pred_region
          _
        $region24: #{tpu_custom_call.1} parent=11 // pred_fallthru
          _
        // Predicated region
        $region25: #{tpu_custom_call.1} parent=11 // pred_check
          %p264 = pneg %p130
        $region26: #{tpu_custom_call.1} parent=11 // pred_check_branch
          %266 = sbr.rel (%p264) target = $region28
        $region27: #{tpu_custom_call.1} parent=11 // pred_region
          _
        $region28: #{tpu_custom_call.1} parent=11 // pred_fallthru
          _
        // Predicated region
        $region29: #{tpu_custom_call.1} parent=11 // pred_check
          %p267 = pneg %p151
        $region30: #{tpu_custom_call.1} parent=11 // pred_check_branch
          %269 = sbr.rel (%p267) target = $region32
        $region31: #{tpu_custom_call.1} parent=11 // pred_region
          _
        $region32: #{tpu_custom_call.1} parent=11 // pred_fallthru
          _
        // Predicated region
        $region33: #{tpu_custom_call.1} parent=11 // pred_check
          %p270 = pneg %p172
        $region34: #{tpu_custom_call.1} parent=11 // pred_check_branch
          %272 = sbr.rel (%p270) target = $region36
        $region35: #{tpu_custom_call.1} parent=11 // pred_region
          _
        $region36: #{tpu_custom_call.1} parent=11 // pred_fallthru
          _
        // Predicated region
        $region37: #{tpu_custom_call.1} parent=11 // pred_check
          %p273 = pneg %p193
        $region38: #{tpu_custom_call.1} parent=11 // pred_check_branch
          %275 = sbr.rel (%p273) target = $region40
        $region39: #{tpu_custom_call.1} parent=11 // pred_region
          _
        $region40: #{tpu_custom_call.1} parent=11 // pred_fallthru
          _
        // Predicated region
        $region41: #{tpu_custom_call.1} parent=11 // pred_check
          %p276 = pneg %p214
        $region42: #{tpu_custom_call.1} parent=11 // pred_check_branch
          %278 = sbr.rel (%p276) target = $region44
        $region43: #{tpu_custom_call.1} parent=11 // pred_region
          _
        $region44: #{tpu_custom_call.1} parent=11 // pred_fallthru
          _
      $region12: #{tpu_custom_call.1} parent=5 // pred_fallthru
        _
      %p279 = scmp.lt.s32.totalorder %s20, 3
      // Predicated region
      $region45: #{tpu_custom_call.1} parent=5 // pred_check
        %p280 = pneg %p279
      $region46: #{tpu_custom_call.1} parent=5 // pred_check_branch
        %282 = sbr.rel (%p280) target = $region48
      $region47: #{tpu_custom_call.1} parent=5 // pred_region
        // Predicated region
        $region49: #{tpu_custom_call.1} parent=47 // pred_check
          %p283 = pneg %p40
        $region50: #{tpu_custom_call.1} parent=47 // pred_check_branch
          %285 = sbr.rel (%p283) target = $region52
        $region51: #{tpu_custom_call.1} parent=47 // pred_region
          %s286 = sand.u32 %s30, 1
          %s287 = sand.u32 %s30, 1
          %s288 = smul.addr %s287, 8
          %s289 = scalar_lea.vmem [#allocation3], %s288
          %s290 = smul.addr %s20, 4
          %s291 = scalar_lea.vmem %s0, %s290
          // Predicated region
          $region53: #{tpu_custom_call.1} parent=51 // pred_check
            _
          $region54: #{tpu_custom_call.1} parent=51 // pred_check_branch
            %293 = sbr.rel (0) target = $region56
          $region55: #{tpu_custom_call.1} parent=51 // pred_region
            // Predicated region
            $region57: #{tpu_custom_call.1} parent=55 // pred_check
              _
            $region58: #{tpu_custom_call.1} parent=55 // pred_check_branch
              %295 = sbr.rel target = $region60
            $region59: #{tpu_custom_call.1} parent=55 // pred_region
              // Predicated region
              $region72: #{tpu_custom_call.1} parent=59 // pred_check
                _
              $region73: #{tpu_custom_call.1} parent=59 // pred_check_branch
                %312 = sbr.rel (0) target = $region75
              $region74: #{tpu_custom_call.1} parent=59 // pred_region
                loop: start=0, step=1, limit=1
                $region76: #{tpu_custom_call.1} parent=74 // loop_pre_header
                  _
                $region77: #{tpu_custom_call.1} parent=74 // loop_header
                  %s314 = sphi 0, %s318
                  %p315 = scmp.ge.s32.totalorder %s314, 1
                  %s319 = sphi %s291, %s291
                  %s320 = sphi %s289, %s289
                $region78: #{tpu_custom_call.1} parent=74 // loop_header_branch
                  %317 = sbr.rel (%p315) target = $region82
                $region79: #{tpu_custom_call.1} parent=74 // loop_body
                  _
                $region80: #{tpu_custom_call.1} parent=74 // loop_footer
                  %s318 = sadd.s32 1, %s314
                $region81: #{tpu_custom_call.1} parent=74 // loop_footer_branch
                  %313 = sbr.rel target = $region77
                $region82: #{tpu_custom_call.1} parent=74 // loop_exit
                  _
                loop: start=0, step=1, limit=1
                $region83: #{tpu_custom_call.1} parent=74 // loop_pre_header
                  _
                $region84: #{tpu_custom_call.1} parent=74 // loop_header
                  %s323 = sphi 0, %s327
                  %p324 = scmp.ge.s32.totalorder %s323, 1
                  %s328 = sphi %s291, %s291
                  %s329 = sphi %s289, %s289
                $region85: #{tpu_custom_call.1} parent=74 // loop_header_branch
                  %326 = sbr.rel (%p324) target = $region89
                $region86: #{tpu_custom_call.1} parent=74 // loop_body
                  %v330 = vld [vmem:[%s328] sm:$0xf]
                  %331 = vst [vmem:[%s329] sm:$0xf] %v330
                  %v332 = vld [vmem:[%s328 + $0xc] sm:$0xf]
                  %333 = vst [vmem:[%s329 + $0x4] sm:$0xf] %v332
                $region87: #{tpu_custom_call.1} parent=74 // loop_footer
                  %s327 = sadd.s32 1, %s323
                $region88: #{tpu_custom_call.1} parent=74 // loop_footer_branch
                  %322 = sbr.rel target = $region84
                $region89: #{tpu_custom_call.1} parent=74 // loop_exit
                  _
              $region75: #{tpu_custom_call.1} parent=59 // pred_fallthru
                _
            $region60: #{tpu_custom_call.1} parent=55 // pred_fallthru
              _
            // Predicated region
            $region61: #{tpu_custom_call.1} parent=55 // pred_check
              _
            $region62: #{tpu_custom_call.1} parent=55 // pred_check_branch
              %297 = sbr.rel (0) target = $region64
            $region63: #{tpu_custom_call.1} parent=55 // pred_region
              loop: start=0, step=1, limit=1
              $region65: #{tpu_custom_call.1} parent=63 // loop_pre_header
                _
              $region66: #{tpu_custom_call.1} parent=63 // loop_header
                %s300 = sphi 0, %s304
                %p301 = scmp.ge.s32.totalorder %s300, 1
                %s305 = sphi %s291, %s291
                %s306 = sphi %s289, %s289
              $region67: #{tpu_custom_call.1} parent=63 // loop_header_branch
                %303 = sbr.rel (%p301) target = $region71
              $region68: #{tpu_custom_call.1} parent=63 // loop_body
                %v307 = vld [vmem:[%s305] sm:$0xf]
                %308 = vst [vmem:[%s306] sm:$0xf] %v307
                %v309 = vld [vmem:[%s305 + $0xc] sm:$0xf]
                %310 = vst [vmem:[%s306 + $0x4] sm:$0xf] %v309
              $region69: #{tpu_custom_call.1} parent=63 // loop_footer
                %s304 = sadd.s32 1, %s300
              $region70: #{tpu_custom_call.1} parent=63 // loop_footer_branch
                %299 = sbr.rel target = $region66
              $region71: #{tpu_custom_call.1} parent=63 // loop_exit
                _
            $region64: #{tpu_custom_call.1} parent=55 // pred_fallthru
              _
          $region56: #{tpu_custom_call.1} parent=51 // pred_fallthru
            _
          %334 = vnop
        $region52: #{tpu_custom_call.1} parent=47 // pred_fallthru
          _
      $region48: #{tpu_custom_call.1} parent=5 // pred_fallthru
        _
      %p335 = scmp.le.s32.totalorder 1, %s20
      %p336 = scmp.lt.s32.totalorder %s20, 4
      %p337 = pnand %p335, %p336
      %p338 = pneg %p337
      // Predicated region
      $region90: #{tpu_custom_call.1} parent=5 // pred_check
        _
      $region91: #{tpu_custom_call.1} parent=5 // pred_check_branch
        %340 = sbr.rel (%p337) target = $region93
      $region92: #{tpu_custom_call.1} parent=5 // pred_region
        %s341 = ssub.s32 %s20, 1
        %s342 = sand.u32 %s33, 1
        %s343 = sand.u32 %s33, 1
        %s344 = smul.addr %s343, 8
        %s345 = scalar_lea.vmem [#allocation3], %s344
        // Predicated region
        $region94: #{tpu_custom_call.1} parent=92 // pred_check
          %p346 = pneg %p46
        $region95: #{tpu_custom_call.1} parent=92 // pred_check_branch
          %348 = sbr.rel (%p346) target = $region97
        $region96: #{tpu_custom_call.1} parent=92 // pred_region
          _
        $region97: #{tpu_custom_call.1} parent=92 // pred_fallthru
          _
        %s349 = sand.u32 %s33, 1
        %s350 = sand.u32 %s33, 1
        %s351 = smul.addr %s350, 8
        %s352 = scalar_lea.vmem [#allocation3], %s351
        %p353 = pneg %p46
        %p354 = pneg %p43
        %p355 = pneg %p67
        %p356 = pneg %p64
        %p357 = pneg %p88
        %p358 = pneg %p85
        %p359 = pneg %p109
        %p360 = pneg %p106
        %p361 = pneg %p130
        %p362 = pneg %p127
        %p363 = pneg %p151
        %p364 = pneg %p148
        %p365 = pneg %p172
        %p366 = pneg %p169
        %p367 = pneg %p193
        %p368 = pneg %p190
        %p369 = pneg %p214
        %p370 = pneg %p211
        %p371 = pneg %p240
        %p372 = pneg %p237
        %s373 = sand.u32 %s227, 1
        %s374 = scalar_lea.sflag [#allocation5], %s373
        %s375 = sand.u32 %s227, 1
        %s376 = scalar_lea.vmem [#allocation4], %s375
        %v378 = vld [vmem:[%s345] sm:$0xf]
        %v379 = vld [vmem:[%s345 + $0x4] sm:$0xf]
        %v380 = vld [vmem:[%s1] sm:$0xf]
        %v381 = vld [vmem:[%s1 + $0x4] sm:$0xf]
        %v382 = vld [vmem:[%s1 + $0x8] sm:$0xf]
        %v383 = vld [vmem:[%s1 + $0xc] sm:$0xf]
        %v384 = vld [vmem:[%s1 + $0x10] sm:$0xf]
        %v385 = vld [vmem:[%s1 + $0x14] sm:$0xf]
        %v386 = vld [vmem:[%s1 + $0x18] sm:$0xf]
        %v387 = vld [vmem:[%s1 + $0x1c] sm:$0xf]
        %v388 = vld [vmem:[%s1 + $0x20] sm:$0xf]
        %v389 = vld [vmem:[%s1 + $0x24] sm:$0xf]
        %v390 = vld [vmem:[%s1 + $0x28] sm:$0xf]
        %v391 = vld [vmem:[%s1 + $0x2c] sm:$0xf]
        %v392 = vld [vmem:[%s1 + $0x30] sm:$0xf]
        %v393 = vld [vmem:[%s1 + $0x34] sm:$0xf]
        %v394 = vld [vmem:[%s1 + $0x38] sm:$0xf]
        %v395 = vld [vmem:[%s1 + $0x3c] sm:$0xf]
        %v396 = vld [vmem:[%s2] sm:$0xff]
        %v397 = vld [vmem:[%s2 + $0x8] sm:$0xff]
        %v398 = vld [vmem:[%s2 + $0x10] sm:$0xff]
        %v399 = vld [vmem:[%s2 + $0x18] sm:$0xff]
        %v400 = vld [vmem:[%s2 + $0x20] sm:$0xff]
        %v401 = vld [vmem:[%s2 + $0x28] sm:$0xff]
        %v402 = vld [vmem:[%s2 + $0x30] sm:$0xff]
        %v403 = vld [vmem:[%s2 + $0x38] sm:$0xff]
        %v404 = vld [vmem:[%s2 + $0x40] sm:$0xff]
        %v405 = vld [vmem:[%s2 + $0x48] sm:$0xff]
        %v406 = vld [vmem:[%s2 + $0x50] sm:$0xff]
        %v407 = vld [vmem:[%s2 + $0x58] sm:$0xff]
        %v408 = vld [vmem:[%s2 + $0x60] sm:$0xff]
        %v409 = vld [vmem:[%s2 + $0x68] sm:$0xff]
        %v410 = vld [vmem:[%s2 + $0x70] sm:$0xff]
        %v411 = vld [vmem:[%s2 + $0x78] sm:$0xff]
        %413 = vset.pattern.permute.xlu0 0
        %414 = vperm.xlu0 %413, %v396
        %v415 = vpop.permute.xlu0 %414
        %418 = vset.pattern.permute.xlu0 0
        %419 = vperm.xlu0 %418, %v397
        %v420 = vpop.permute.xlu0 %419
        %423 = vset.pattern.permute.xlu0 0
        %424 = vperm.xlu0 %423, %v398
        %v425 = vpop.permute.xlu0 %424
        %428 = vset.pattern.permute.xlu0 0
        %429 = vperm.xlu0 %428, %v399
        %v430 = vpop.permute.xlu0 %429
        %433 = vset.pattern.permute.xlu0 0
        %434 = vperm.xlu0 %433, %v400
        %v435 = vpop.permute.xlu0 %434
        %438 = vset.pattern.permute.xlu0 0
        %439 = vperm.xlu0 %438, %v401
        %v440 = vpop.permute.xlu0 %439
        %443 = vset.pattern.permute.xlu0 0
        %444 = vperm.xlu0 %443, %v402
        %v445 = vpop.permute.xlu0 %444
        %448 = vset.pattern.permute.xlu0 0
        %449 = vperm.xlu0 %448, %v403
        %v450 = vpop.permute.xlu0 %449
        %453 = vset.pattern.permute.xlu0 0
        %454 = vperm.xlu0 %453, %v404
        %v455 = vpop.permute.xlu0 %454
        %458 = vset.pattern.permute.xlu0 0
        %459 = vperm.xlu0 %458, %v405
        %v460 = vpop.permute.xlu0 %459
        %463 = vset.pattern.permute.xlu0 0
        %464 = vperm.xlu0 %463, %v406
        %v465 = vpop.permute.xlu0 %464
        %468 = vset.pattern.permute.xlu0 0
        %469 = vperm.xlu0 %468, %v407
        %v470 = vpop.permute.xlu0 %469
        %473 = vset.pattern.permute.xlu0 0
        %474 = vperm.xlu0 %473, %v408
        %v475 = vpop.permute.xlu0 %474
        %478 = vset.pattern.permute.xlu0 0
        %479 = vperm.xlu0 %478, %v409
        %v480 = vpop.permute.xlu0 %479
        %483 = vset.pattern.permute.xlu0 0
        %484 = vperm.xlu0 %483, %v410
        %v485 = vpop.permute.xlu0 %484
        %488 = vset.pattern.permute.xlu0 0
        %489 = vperm.xlu0 %488, %v411
        %v490 = vpop.permute.xlu0 %489
        %v508 = vunpack.c.l.b16 %v380
        %v509 = vunpack.c.l.b16 %v381
        %v510 = vunpack.c.l.b16 %v382
        %v511 = vunpack.c.l.b16 %v383
        %v512 = vunpack.c.l.b16 %v384
        %v513 = vunpack.c.l.b16 %v385
        %v514 = vunpack.c.l.b16 %v386
        %v515 = vunpack.c.l.b16 %v387
        %v516 = vunpack.c.l.b16 %v388
        %v517 = vunpack.c.l.b16 %v389
        %v518 = vunpack.c.l.b16 %v390
        %v519 = vunpack.c.l.b16 %v391
        %v520 = vunpack.c.l.b16 %v392
        %v521 = vunpack.c.l.b16 %v393
        %v522 = vunpack.c.l.b16 %v394
        %v523 = vunpack.c.l.b16 %v395
        %v524 = vpack.c.b16 %v509, %v508
        %v525 = vpack.c.b16 %v511, %v510
        %v526 = vpack.c.b16 %v513, %v512
        %v527 = vpack.c.b16 %v515, %v514
        %v528 = vpack.c.b16 %v517, %v516
        %v529 = vpack.c.b16 %v519, %v518
        %v530 = vpack.c.b16 %v521, %v520
        %v531 = vpack.c.b16 %v523, %v522
        %v534 = vunpack.c.l.b16 %v378
        %v535 = vunpack.c.l.b16 %v379
        %v536 = vpack.c.b16 %v535, %v534
        %vm538 = vcmask 130048
        %v540 = vsel %vm538, %v524, 0
        %v543 = vsel %vm538, %v525, 0
        %v546 = vsel %vm538, %v526, 0
        %v549 = vsel %vm538, %v527, 0
        %v552 = vsel %vm538, %v528, 0
        %v555 = vsel %vm538, %v529, 0
        %v558 = vsel %vm538, %v530, 0
        %v561 = vsel %vm538, %v531, 0
        %563 = vmatprep.subr.bf16.mxu0 0
        %564 = vmatpush1.bf16.msra.mxu0 %v536
        %565 = vmatprep.subr.bf16.mxu0 0
        %566 = vmatpush1.bf16.msra.mxu0 0
        %567 = vmatprep.subr.bf16.mxu0 0
        %568 = vmatpush1.bf16.msra.mxu0 0
        %569 = vmatprep.subr.bf16.mxu0 0
        %570 = vmatpush1.bf16.msra.mxu0 0
        %571 = vmatprep.subr.bf16.mxu0 0
        %572 = vmatpush1.bf16.msra.mxu0 0
        %573 = vmatprep.subr.bf16.mxu0 0
        %574 = vmatpush1.bf16.msra.mxu0 0
        %575 = vmatprep.subr.bf16.mxu0 0
        %576 = vmatpush1.bf16.msra.mxu0 0
        %577 = vmatprep.subr.bf16.mxu0 0
        %578 = vmatpush1.bf16.msra.mxu0 0
        %579 = vmatprep.subr.bf16.mxu0 0
        %580 = vmatpush1.bf16.msra.mxu0 0
        %581 = vmatprep.subr.bf16.mxu0 0
        %582 = vmatpush1.bf16.msra.mxu0 0
        %583 = vmatprep.subr.bf16.mxu0 0
        %584 = vmatpush1.bf16.msra.mxu0 0
        %585 = vmatprep.subr.bf16.mxu0 0
        %586 = vmatpush1.bf16.msra.mxu0 0
        %587 = vmatprep.subr.bf16.mxu0 0
        %588 = vmatpush1.bf16.msra.mxu0 0
        %589 = vmatprep.subr.bf16.mxu0 0
        %590 = vmatpush1.bf16.msra.mxu0 0
        %591 = vmatprep.subr.bf16.mxu0 0
        %592 = vmatpush1.bf16.msra.mxu0 0
        %593 = vmatprep.subr.bf16.mxu0 0
        %594 = vmatpush1.bf16.msra.mxu0 0
        %595 = vmatprep.mubr.bf16.mxu0 0
        %596 = vmatmul.mubr.bf16.gmra.mrb[0].mxu0 %v540
        %v597 = vpop.f32.mrb[0].mxu0
        %v598 = vadd.f32 %v415, %v597
        %v599 = vpop.f32.mrb[0].mxu0
        %v600 = vpop.f32.mrb[0].mxu0
        %v601 = vadd.f32 %v420, %v600
        %v602 = vpop.f32.mrb[0].mxu0
        %603 = vmatprep.mubr.bf16.mxu0 0
        %604 = vmatmul.mubr.bf16.gmra.mrb[0].mxu0 %v543
        %v605 = vpop.f32.mrb[0].mxu0
        %v606 = vadd.f32 %v425, %v605
        %v607 = vpop.f32.mrb[0].mxu0
        %v608 = vpop.f32.mrb[0].mxu0
        %v609 = vadd.f32 %v430, %v608
        %v610 = vpop.f32.mrb[0].mxu0
        %611 = vmatprep.mubr.bf16.mxu0 0
        %612 = vmatmul.mubr.bf16.gmra.mrb[0].mxu0 %v546
        %v613 = vpop.f32.mrb[0].mxu0
        %v614 = vadd.f32 %v435, %v613
        %v615 = vpop.f32.mrb[0].mxu0
        %v616 = vpop.f32.mrb[0].mxu0
        %v617 = vadd.f32 %v440, %v616
        %v618 = vpop.f32.mrb[0].mxu0
        %619 = vmatprep.mubr.bf16.mxu0 0
        %620 = vmatmul.mubr.bf16.gmra.mrb[0].mxu0 %v549
        %v621 = vpop.f32.mrb[0].mxu0
        %v622 = vadd.f32 %v445, %v621
        %v623 = vpop.f32.mrb[0].mxu0
        %v624 = vpop.f32.mrb[0].mxu0
        %v625 = vadd.f32 %v450, %v624
        %v626 = vpop.f32.mrb[0].mxu0
        %627 = vmatprep.mubr.bf16.mxu0 0
        %628 = vmatmul.mubr.bf16.gmra.mrb[0].mxu0 %v552
        %v629 = vpop.f32.mrb[0].mxu0
        %v630 = vadd.f32 %v455, %v629
        %v631 = vpop.f32.mrb[0].mxu0
        %v632 = vpop.f32.mrb[0].mxu0
        %v633 = vadd.f32 %v460, %v632
        %v634 = vpop.f32.mrb[0].mxu0
        %635 = vmatprep.mubr.bf16.mxu0 0
        %636 = vmatmul.mubr.bf16.gmra.mrb[0].mxu0 %v555
        %v637 = vpop.f32.mrb[0].mxu0
        %v638 = vadd.f32 %v465, %v637
        %v639 = vpop.f32.mrb[0].mxu0
        %v640 = vpop.f32.mrb[0].mxu0
        %v641 = vadd.f32 %v470, %v640
        %v642 = vpop.f32.mrb[0].mxu0
        %643 = vmatprep.mubr.bf16.mxu0 0
        %644 = vmatmul.mubr.bf16.gmra.mrb[0].mxu0 %v558
        %v645 = vpop.f32.mrb[0].mxu0
        %v646 = vadd.f32 %v475, %v645
        %v647 = vpop.f32.mrb[0].mxu0
        %v648 = vpop.f32.mrb[0].mxu0
        %v649 = vadd.f32 %v480, %v648
        %v650 = vpop.f32.mrb[0].mxu0
        %651 = vmatprep.mubr.bf16.mxu0 0
        %652 = vmatmul.mubr.bf16.gmra.mrb[0].mxu0 %v561
        %v653 = vpop.f32.mrb[0].mxu0
        %v654 = vadd.f32 %v485, %v653
        %v655 = vpop.f32.mrb[0].mxu0
        %v656 = vpop.f32.mrb[0].mxu0
        %v657 = vadd.f32 %v490, %v656
        %v658 = vpop.f32.mrb[0].mxu0
        %659 = vdwg.mxu0
        %v660 = vmax.f32 %v598, 0.0
        %v661 = vmax.f32 %v601, 0.0
        %v662 = vmax.f32 %v606, 0.0
        %v663 = vmax.f32 %v609, 0.0
        %v664 = vmax.f32 %v614, 0.0
        %v665 = vmax.f32 %v617, 0.0
        %v666 = vmax.f32 %v622, 0.0
        %v667 = vmax.f32 %v625, 0.0
        %v668 = vmax.f32 %v630, 0.0
        %v669 = vmax.f32 %v633, 0.0
        %v670 = vmax.f32 %v638, 0.0
        %v671 = vmax.f32 %v641, 0.0
        %v672 = vmax.f32 %v646, 0.0
        %v673 = vmax.f32 %v649, 0.0
        %v674 = vmax.f32 %v654, 0.0
        %v675 = vmax.f32 %v657, 0.0
        %v676 = vld [vmem:[%s3] sm:$0xf]
        %v677 = vld [vmem:[%s3 + $0x4] sm:$0xf]
        %v678 = vld [vmem:[%s3 + $0x8] sm:$0xf]
        %v679 = vld [vmem:[%s3 + $0xc] sm:$0xf]
        %v680 = vld [vmem:[%s3 + $0x10] sm:$0xf]
        %v681 = vld [vmem:[%s3 + $0x14] sm:$0xf]
        %v682 = vld [vmem:[%s3 + $0x18] sm:$0xf]
        %v683 = vld [vmem:[%s3 + $0x1c] sm:$0xf]
        %v684 = vpack.c.bf16 %v661, %v660
        %v685 = vpack.c.bf16 %v663, %v662
        %v686 = vpack.c.bf16 %v665, %v664
        %v687 = vpack.c.bf16 %v667, %v666
        %v688 = vpack.c.bf16 %v669, %v668
        %v689 = vpack.c.bf16 %v671, %v670
        %v690 = vpack.c.bf16 %v673, %v672
        %v691 = vpack.c.bf16 %v675, %v674
        %v692 = vld [vmem:[%s4] sm:$0xff]
        %v693 = vld [vmem:[%s4 + $0x8] sm:$0xff]
        %v694 = vld [vmem:[%s4 + $0x10] sm:$0xff]
        %v695 = vld [vmem:[%s4 + $0x18] sm:$0xff]
        %v696 = vld [vmem:[%s4 + $0x20] sm:$0xff]
        %v697 = vld [vmem:[%s4 + $0x28] sm:$0xff]
        %v698 = vld [vmem:[%s4 + $0x30] sm:$0xff]
        %v699 = vld [vmem:[%s4 + $0x38] sm:$0xff]
        %701 = vset.pattern.permute.xlu0 0
        %702 = vperm.xlu0 %701, %v692
        %v703 = vpop.permute.xlu0 %702
        %706 = vset.pattern.permute.xlu0 0
        %707 = vperm.xlu0 %706, %v693
        %v708 = vpop.permute.xlu0 %707
        %711 = vset.pattern.permute.xlu0 0
        %712 = vperm.xlu0 %711, %v694
        %v713 = vpop.permute.xlu0 %712
        %716 = vset.pattern.permute.xlu0 0
        %717 = vperm.xlu0 %716, %v695
        %v718 = vpop.permute.xlu0 %717
        %721 = vset.pattern.permute.xlu0 0
        %722 = vperm.xlu0 %721, %v696
        %v723 = vpop.permute.xlu0 %722
        %726 = vset.pattern.permute.xlu0 0
        %727 = vperm.xlu0 %726, %v697
        %v728 = vpop.permute.xlu0 %727
        %731 = vset.pattern.permute.xlu0 0
        %732 = vperm.xlu0 %731, %v698
        %v733 = vpop.permute.xlu0 %732
        %736 = vset.pattern.permute.xlu0 0
        %737 = vperm.xlu0 %736, %v699
        %v738 = vpop.permute.xlu0 %737
        %v748 = vunpack.c.l.b16 %v676
        %v749 = vunpack.c.l.b16 %v677
        %v750 = vunpack.c.l.b16 %v678
        %v751 = vunpack.c.l.b16 %v679
        %v752 = vunpack.c.l.b16 %v680
        %v753 = vunpack.c.l.b16 %v681
        %v754 = vunpack.c.l.b16 %v682
        %v755 = vunpack.c.l.b16 %v683
        %v756 = vpack.c.b16 %v749, %v748
        %v757 = vpack.c.b16 %v751, %v750
        %v758 = vpack.c.b16 %v753, %v752
        %v759 = vpack.c.b16 %v755, %v754
        %764 = vmatprep.subr.bf16.mxu0 0
        %765 = vmatpush1.bf16.msra.mxu0 %v684
        %766 = vmatprep.subr.bf16.mxu0 0
        %767 = vmatpush1.bf16.msra.mxu0 %v685
        %768 = vmatprep.subr.bf16.mxu0 0
        %769 = vmatpush1.bf16.msra.mxu0 %v686
        %770 = vmatprep.subr.bf16.mxu0 0
        %771 = vmatpush1.bf16.msra.mxu0 %v687
        %772 = vmatprep.subr.bf16.mxu0 0
        %773 = vmatpush1.bf16.msra.mxu0 %v688
        %774 = vmatprep.subr.bf16.mxu0 0
        %775 = vmatpush1.bf16.msra.mxu0 %v689
        %776 = vmatprep.subr.bf16.mxu0 0
        %777 = vmatpush1.bf16.msra.mxu0 %v690
        %778 = vmatprep.subr.bf16.mxu0 0
        %779 = vmatpush1.bf16.msra.mxu0 %v691
        %780 = vmatprep.subr.bf16.mxu0 0
        %781 = vmatpush1.bf16.msra.mxu0 0
        %782 = vmatprep.subr.bf16.mxu0 0
        %783 = vmatpush1.bf16.msra.mxu0 0
        %784 = vmatprep.subr.bf16.mxu0 0
        %785 = vmatpush1.bf16.msra.mxu0 0
        %786 = vmatprep.subr.bf16.mxu0 0
        %787 = vmatpush1.bf16.msra.mxu0 0
        %788 = vmatprep.subr.bf16.mxu0 0
        %789 = vmatpush1.bf16.msra.mxu0 0
        %790 = vmatprep.subr.bf16.mxu0 0
        %791 = vmatpush1.bf16.msra.mxu0 0
        %792 = vmatprep.subr.bf16.mxu0 0
        %793 = vmatpush1.bf16.msra.mxu0 0
        %794 = vmatprep.subr.bf16.mxu0 0
        %795 = vmatpush1.bf16.msra.mxu0 0
        %796 = vmatprep.mubr.bf16.mxu0 0
        %797 = vmatmul.mubr.bf16.gmra.mrb[0].mxu0 %v756
        %v798 = vpop.f32.mrb[0].mxu0
        %v799 = vadd.f32 %v703, %v798
        %v800 = vpop.f32.mrb[0].mxu0
        %v801 = vpop.f32.mrb[0].mxu0
        %v802 = vadd.f32 %v708, %v801
        %v803 = vpop.f32.mrb[0].mxu0
        %804 = vmatprep.mubr.bf16.mxu0 0
        %805 = vmatmul.mubr.bf16.gmra.mrb[0].mxu0 %v757
        %v806 = vpop.f32.mrb[0].mxu0
        %v807 = vadd.f32 %v713, %v806
        %v808 = vpop.f32.mrb[0].mxu0
        %v809 = vpop.f32.mrb[0].mxu0
        %v810 = vadd.f32 %v718, %v809
        %v811 = vpop.f32.mrb[0].mxu0
        %812 = vmatprep.mubr.bf16.mxu0 0
        %813 = vmatmul.mubr.bf16.gmra.mrb[0].mxu0 %v758
        %v814 = vpop.f32.mrb[0].mxu0
        %v815 = vadd.f32 %v723, %v814
        %v816 = vpop.f32.mrb[0].mxu0
        %v817 = vpop.f32.mrb[0].mxu0
        %v818 = vadd.f32 %v728, %v817
        %v819 = vpop.f32.mrb[0].mxu0
        %820 = vmatprep.mubr.bf16.mxu0 0
        %821 = vmatmul.mubr.bf16.gmra.mrb[0].mxu0 %v759
        %v822 = vpop.f32.mrb[0].mxu0
        %v823 = vadd.f32 %v733, %v822
        %v824 = vpop.f32.mrb[0].mxu0
        %v825 = vpop.f32.mrb[0].mxu0
        %v826 = vadd.f32 %v738, %v825
        %v827 = vpop.f32.mrb[0].mxu0
        %828 = vdwg.mxu0
        %v829 = vmax.f32 %v799, 0.0
        %v830 = vmax.f32 %v802, 0.0
        %v831 = vmax.f32 %v807, 0.0
        %v832 = vmax.f32 %v810, 0.0
        %v833 = vmax.f32 %v815, 0.0
        %v834 = vmax.f32 %v818, 0.0
        %v835 = vmax.f32 %v823, 0.0
        %v836 = vmax.f32 %v826, 0.0
        %v837 = vld [vmem:[%s5] sm:$0xf]
        %v838 = vld [vmem:[%s5 + $0x4] sm:$0xf]
        %v839 = vld [vmem:[%s5 + $0x8] sm:$0xf]
        %v840 = vld [vmem:[%s5 + $0xc] sm:$0xf]
        %v841 = vpack.c.bf16 %v830, %v829
        %v842 = vpack.c.bf16 %v832, %v831
        %v843 = vpack.c.bf16 %v834, %v833
        %v844 = vpack.c.bf16 %v836, %v835
        %v845 = vld [vmem:[%s6] sm:$0xff]
        %v846 = vld [vmem:[%s6 + $0x8] sm:$0xff]
        %v847 = vld [vmem:[%s6 + $0x10] sm:$0xff]
        %v848 = vld [vmem:[%s6 + $0x18] sm:$0xff]
        %850 = vset.pattern.permute.xlu0 0
        %851 = vperm.xlu0 %850, %v845
        %v852 = vpop.permute.xlu0 %851
        %855 = vset.pattern.permute.xlu0 0
        %856 = vperm.xlu0 %855, %v846
        %v857 = vpop.permute.xlu0 %856
        %860 = vset.pattern.permute.xlu0 0
        %861 = vperm.xlu0 %860, %v847
        %v862 = vpop.permute.xlu0 %861
        %865 = vset.pattern.permute.xlu0 0
        %866 = vperm.xlu0 %865, %v848
        %v867 = vpop.permute.xlu0 %866
        %v873 = vunpack.c.l.b16 %v837
        %v874 = vunpack.c.l.b16 %v838
        %v875 = vunpack.c.l.b16 %v839
        %v876 = vunpack.c.l.b16 %v840
        %v877 = vpack.c.b16 %v874, %v873
        %v878 = vpack.c.b16 %v876, %v875
        %vm879 = vcmask 523264
        %v881 = vsel %vm879, %v877, 0
        %v884 = vsel %vm879, %v878, 0
        %886 = vmatprep.subr.bf16.mxu0 0
        %887 = vmatpush1.bf16.msra.mxu0 %v841
        %888 = vmatprep.subr.bf16.mxu0 0
        %889 = vmatpush1.bf16.msra.mxu0 %v842
        %890 = vmatprep.subr.bf16.mxu0 0
        %891 = vmatpush1.bf16.msra.mxu0 %v843
        %892 = vmatprep.subr.bf16.mxu0 0
        %893 = vmatpush1.bf16.msra.mxu0 %v844
        %894 = vmatprep.subr.bf16.mxu0 0
        %895 = vmatpush1.bf16.msra.mxu0 0
        %896 = vmatprep.subr.bf16.mxu0 0
        %897 = vmatpush1.bf16.msra.mxu0 0
        %898 = vmatprep.subr.bf16.mxu0 0
        %899 = vmatpush1.bf16.msra.mxu0 0
        %900 = vmatprep.subr.bf16.mxu0 0
        %901 = vmatpush1.bf16.msra.mxu0 0
        %902 = vmatprep.subr.bf16.mxu0 0
        %903 = vmatpush1.bf16.msra.mxu0 0
        %904 = vmatprep.subr.bf16.mxu0 0
        %905 = vmatpush1.bf16.msra.mxu0 0
        %906 = vmatprep.subr.bf16.mxu0 0
        %907 = vmatpush1.bf16.msra.mxu0 0
        %908 = vmatprep.subr.bf16.mxu0 0
        %909 = vmatpush1.bf16.msra.mxu0 0
        %910 = vmatprep.subr.bf16.mxu0 0
        %911 = vmatpush1.bf16.msra.mxu0 0
        %912 = vmatprep.subr.bf16.mxu0 0
        %913 = vmatpush1.bf16.msra.mxu0 0
        %914 = vmatprep.subr.bf16.mxu0 0
        %915 = vmatpush1.bf16.msra.mxu0 0
        %916 = vmatprep.subr.bf16.mxu0 0
        %917 = vmatpush1.bf16.msra.mxu0 0
        %918 = vmatprep.mubr.bf16.mxu0 0
        %919 = vmatmul.mubr.bf16.gmra.mrb[0].mxu0 %v881
        %v920 = vpop.f32.mrb[0].mxu0
        %v921 = vadd.f32 %v852, %v920
        %v922 = vpop.f32.mrb[0].mxu0
        %v923 = vpop.f32.mrb[0].mxu0
        %v924 = vadd.f32 %v857, %v923
        %v925 = vpop.f32.mrb[0].mxu0
        %926 = vmatprep.mubr.bf16.mxu0 0
        %927 = vmatmul.mubr.bf16.gmra.mrb[0].mxu0 %v884
        %v928 = vpop.f32.mrb[0].mxu0
        %v929 = vadd.f32 %v862, %v928
        %v930 = vpop.f32.mrb[0].mxu0
        %v931 = vpop.f32.mrb[0].mxu0
        %v932 = vadd.f32 %v867, %v931
        %v933 = vpop.f32.mrb[0].mxu0
        %934 = vdwg.mxu0
        %v935 = vmax.f32 %v921, 0.0
        %v936 = vmax.f32 %v924, 0.0
        %v937 = vmax.f32 %v929, 0.0
        %v938 = vmax.f32 %v932, 0.0
        %v939 = vld [vmem:[%s7] sm:$0xff]
        %v940 = vld [vmem:[%s7 + $0x8] sm:$0xff]
        %v941 = vld [vmem:[%s7 + $0x10] sm:$0xff]
        %v942 = vld [vmem:[%s7 + $0x18] sm:$0xff]
        %944 = vset.pattern.permute.xlu0 0
        %945 = vperm.xlu0 %944, %v939
        %v946 = vpop.permute.xlu0 %945
        %949 = vset.pattern.permute.xlu0 0
        %950 = vperm.xlu0 %949, %v940
        %v951 = vpop.permute.xlu0 %950
        %954 = vset.pattern.permute.xlu0 0
        %955 = vperm.xlu0 %954, %v941
        %v956 = vpop.permute.xlu0 %955
        %959 = vset.pattern.permute.xlu0 0
        %960 = vperm.xlu0 %959, %v942
        %v961 = vpop.permute.xlu0 %960
        %v963 = vmul.f32 %v935, %v946
        %v964 = vmul.f32 %v936, %v951
        %v965 = vmul.f32 %v937, %v956
        %v966 = vmul.f32 %v938, %v961
        %v967 = vadd.f32 %v963, %v964
        %v968 = vadd.f32 %v967, %v965
        %v969 = vadd.f32 %v968, %v966
        %v970 = vrot.slane %v969, 4
        %v971 = vadd.f32 %v969, %v970
        %v972 = vrot.slane %v971, 2
        %v973 = vadd.f32 %v971, %v972
        %v974 = vrot.slane %v973, 1
        %v975 = vadd.f32 %v973, %v974
        %v976 = vld [vmem:[#allocation2] sm:$0x1]
        %978 = vset.pattern.permute.xlu0 0
        %979 = vperm.xlu0 %978, %v976
        %v980 = vpop.permute.xlu0 %979
        %v982 = vlaneseq
        %v983 = vshrl.u32 %v982, 7
        %v984 = vsub.s32 0, %v983
        %v985 = vrot.slane %v980, %v984
        %v986 = vadd.f32 %v975, %v985
        %987 = vst [vmem:[%s376] sm:$0x1] %v986
        %s988 = sand.u32 %s227, 1
        %s989 = scalar_lea.sflag [#allocation5], %s988
        %s990 = sand.u32 %s227, 1
        %s991 = scalar_lea.vmem [#allocation4], %s990
        // Predicated region
        $region98: #{tpu_custom_call.1} parent=92 // pred_check
          %p992 = pneg %p237
        $region99: #{tpu_custom_call.1} parent=92 // pred_check_branch
          %994 = sbr.rel (%p992) target = $region101
        $region100: #{tpu_custom_call.1} parent=92 // pred_region
          %s996 = ssub.s32 16, 16
          %997 = vsyncadd %s989, %s996
          %s998 = smul.addr %s25, 16
          %s999 = scalar_lea.hbm %s9, %s998
          %s1001 = sshll.u32 %s991, 4
          %s1002 = int_to_ptr.vmem [resolvable:$true] %s1001
          %1004 = dma.vmem_to_hbm [thread:$0]  %s1002, 16, %s999, %s989
        $region101: #{tpu_custom_call.1} parent=92 // pred_fallthru
          _
      $region93: #{tpu_custom_call.1} parent=5 // pred_fallthru
        _
      %p1005 = scmp.le.s32.totalorder 2, %s20
      // Predicated region
      $region102: #{tpu_custom_call.1} parent=5 // pred_check
        %p1006 = pneg %p1005
      $region103: #{tpu_custom_call.1} parent=5 // pred_check_branch
        %1008 = sbr.rel (%p1006) target = $region105
      $region104: #{tpu_custom_call.1} parent=5 // pred_region
        %s1009 = ssub.s32 %s20, 2
        // Predicated region
        $region106: #{tpu_custom_call.1} parent=104 // pred_check
          %p1010 = pneg %p243
        $region107: #{tpu_custom_call.1} parent=104 // pred_check_branch
          %1012 = sbr.rel (%p1010) target = $region109
        $region108: #{tpu_custom_call.1} parent=104 // pred_region
          %s1013 = sand.u32 %s228, 1
          %s1014 = scalar_lea.sflag [#allocation5], %s1013
          %s1015 = sand.u32 %s228, 1
          %s1016 = scalar_lea.vmem [#allocation4], %s1015
          %1017 = dma.done %s1014, 16
        $region109: #{tpu_custom_call.1} parent=104 // pred_fallthru
          _
      $region105: #{tpu_custom_call.1} parent=5 // pred_fallthru
        _
    $region6: #{tpu_custom_call.1} parent=1 // loop_footer
      %s24 = sadd.s32 1, %s20
    $region7: #{tpu_custom_call.1} parent=1 // loop_footer_branch
      %19 = sbr.rel target = $region3
    $region8: #{tpu_custom_call.1} parent=1 // loop_exit
      _
    %1018 = vsyncpa [#allocation5], 1
    %s1019 = scalar_lea.sflag [#allocation5], 1
    %1020 = vsyncpa %s1019, 1

</llo_original>
